<compile_context>
chip_gen: v7x
topology: tpu7x:2x2x1
jax: 0.10.0
libtpu: 0.0.40
codegen_flags: <defaults>
</compile_context>

<pallas_src>
import functools

import jax
import jax.numpy as jnp
from jax import lax
from jax.experimental import pallas as pl
from jax.experimental.pallas import tpu as pltpu


# ----------------------------------------------------------------------------
# Pallas kernel: fused embedding gather + MLP + predict head for one batch tile
# ----------------------------------------------------------------------------
def _fused_dnn_kernel(field_num, emb_dim, num_hidden, idx_ref, emb_ref, *refs):
    """refs = (w1, b1, ..., wH, bH, head_w, head_b, o_ref).

    w_l: (in, out) f32    b_l: (1, out) f32
    head_w: (1, Dlast) f32 (PyTorch layout)    head_b: (1, 1) f32
    o_ref: (1, 1, batch_tile) f32 -- lane-dense score row for this tile.
    """
    o_ref = refs[-1]
    p = refs[:-1]

    idx = idx_ref[...]                              # (bt, field_num) int32
    emb = emb_ref[...].astype(jnp.float32)          # (feature_num, emb_dim)
    bt = idx.shape[0]
    feature_num = emb.shape[0]

    # ---- fused gather + first Linear -------------------------------------
    # x[:, f*emb:(f+1)*emb] = E[idx[:, f]] is realized as a one-hot matmul and
    # immediately projected through the matching slice of W1, accumulating the
    # per-field contributions.  This avoids materializing the gathered
    # activations in HBM and avoids any (bt, field*emb) reshape in-kernel.
    # TODO(synk): for production-sized tables (feature_num >> VMEM) replace
    # this with a manual DMA gather (scalar-prefetched indices + make_async_copy)
    # instead of a VMEM-resident table / one-hot matmul.
    w1 = p[0][...]                                  # (field*emb, d1)
    b1 = p[1][...]                                  # (1, d1)
    d1 = w1.shape[1]
    iota = lax.broadcasted_iota(jnp.int32, (bt, feature_num), 1)
    acc = jnp.zeros((bt, d1), jnp.float32)
    for f in range(field_num):
        onehot = (idx[:, f:f + 1] == iota).astype(jnp.float32)            # (bt, feat)
        x_f = jnp.dot(onehot, emb, preferred_element_type=jnp.float32)    # (bt, emb)
        w1_f = w1[f * emb_dim:(f + 1) * emb_dim, :]                       # (emb, d1)
        acc = acc + jnp.dot(x_f, w1_f, preferred_element_type=jnp.float32)
    h = jnp.maximum(acc + b1, 0.0)                  # ReLU (Dropout = identity, eval)

    # ---- remaining hidden layers: Linear -> ReLU --------------------------
    for l in range(1, num_hidden):
        w = p[2 * l][...]
        b = p[2 * l + 1][...]
        h = jnp.maximum(jnp.dot(h, w, preferred_element_type=jnp.float32) + b, 0.0)

    # ---- predict head, emitted lane-dense ---------------------------------
    # (1, Dlast) @ (Dlast, bt) -> (1, bt): the score row lands lane-major so
    # the store is a full-width vst instead of a 1/128-lane masked store.
    head_w = p[2 * num_hidden][...]                 # (1, Dlast)
    head_b = p[2 * num_hidden + 1][...]             # (1, 1)
    score_row = jnp.dot(head_w, h.T, preferred_element_type=jnp.float32) + head_b
    o_ref[...] = score_row[None].astype(o_ref.dtype)          # (1, 1, bt)


# ----------------------------------------------------------------------------
# Wrapper
# ----------------------------------------------------------------------------
def _choose_batch_tile(batch):
    # ~512 rows per grid step: big enough to amortize per-step overhead
    # (~0.35 us) and fill the MXU M dimension, small enough to leave VMEM
    # headroom on v7x (64 MiB) and to give the pipeline / both v7x TensorCores
    # many grid steps at production batch sizes.
    return min(512, max(8, ((batch + 7) // 8) * 8))


def fused_dnn(x_idx, emb_table, weights, biases, head_w, head_b, *,
              field_num, emb_dim, batch_tile=None):
    """x_idx: (B, field_num) int32 feature ids -> (B,) f32 scores."""
    x_idx = x_idx.astype(jnp.int32)
    B, F = x_idx.shape
    assert F == field_num
    feature_num, emb_dim_t = emb_table.shape
    assert emb_dim_t == emb_dim
    num_hidden = len(weights)
    assert num_hidden >= 1 and len(biases) == num_hidden

    if batch_tile is None:
        batch_tile = _choose_batch_tile(B)
    assert batch_tile % 8 == 0, "batch_tile must be a multiple of 8 (f32 sublanes)"

    num_tiles = pl.cdiv(B, batch_tile)
    b_pad = num_tiles * batch_tile
    if b_pad != B:
        # Index 0 is a valid (harmless) gather for padded rows; sliced off below.
        x_idx = jnp.pad(x_idx, ((0, b_pad - B), (0, 0)))

    # --- VMEM guard: v7x has 64 MiB physical (32 MiB scoped default) --------
    param_bytes = 4 * (emb_table.size + head_w.size + head_b.size
                       + sum(w.size + b.size for w, b in zip(weights, biases)))
    widest = max([feature_num, field_num * emb_dim] + [w.shape[1] for w in weights])
    vmem_est = (2 * param_bytes                          # params (conservative x2)
                + 2 * batch_tile * (field_num * 4 + 4)   # idx in + score out, double-buffered
                + 3 * 4 * batch_tile * widest)           # live activations (loose bound)
    assert vmem_est < 24 * 1024 * 1024, (
        f"batch_tile={batch_tile} needs ~{vmem_est >> 20} MiB VMEM; lower batch_tile")

    kernel = functools.partial(_fused_dnn_kernel, field_num, emb_dim, num_hidden)

    in_specs = [
        # indices: the only per-tile HBM input stream
        pl.BlockSpec((batch_tile, field_num), lambda i: (i, 0)),
        # embedding table: whole array, constant index_map (DMA'd once)
        pl.BlockSpec((feature_num, emb_dim), lambda i: (0, 0)),
    ]
    flat_params = []
    for w, b in zip(weights, biases):
        in_specs.append(pl.BlockSpec(w.shape, lambda i: (0, 0)))
        in_specs.append(pl.BlockSpec(b.shape, lambda i: (0, 0)))
        flat_params += [w, b]
    in_specs.append(pl.BlockSpec(head_w.shape, lambda i: (0, 0)))
    in_specs.append(pl.BlockSpec(head_b.shape, lambda i: (0, 0)))
    flat_params += [head_w, head_b]

    # Lane-dense output: (num_tiles, 1, batch_tile) with block (1, 1, batch_tile).
    # The unit middle dim keeps the block's last-two dims equal to the array's.
    out_specs = pl.BlockSpec((1, 1, batch_tile), lambda i: (i, 0, 0))
    out_shape = jax.ShapeDtypeStruct((num_tiles, 1, batch_tile), jnp.float32)

    out = pl.pallas_call(
        kernel,
        out_shape=out_shape,
        grid_spec=pltpu.PrefetchScalarGridSpec(
            num_scalar_prefetch=0,
            grid=(num_tiles,),
            in_specs=in_specs,
            out_specs=out_specs,
        ),
        compiler_params=pltpu.CompilerParams(
            dimension_semantics=("parallel",),   # shard batch tiles over v7x's 2 TCs
        ),
    )(x_idx, emb_table, *flat_params)

    return out.reshape(b_pad)[:B]


def dnn_forward(params, x_idx, *, field_num, emb_dim, batch_tile=None):
    return fused_dnn(x_idx, params["embedding"], params["weights"],
                     params["biases"], params["head_w"], params["head_b"],
                     field_num=field_num, emb_dim=emb_dim, batch_tile=batch_tile)


# ----------------------------------------------------------------------------
# Pure-JAX reference (mirrors the PyTorch forward) for validation
# ----------------------------------------------------------------------------
def dnn_reference(params, x_idx, *, field_num, emb_dim):
    xv = jnp.take(params["embedding"], x_idx, axis=0)
    h = xv.reshape(x_idx.shape[0], field_num * emb_dim)
    for w, b in zip(params["weights"], params["biases"]):
        h = jnp.maximum(jnp.dot(h, w, precision=lax.Precision.HIGHEST) + b, 0.0)
    score = jnp.dot(h, params["head_w"].T, precision=lax.Precision.HIGHEST) + params["head_b"]
    return jnp.squeeze(score, axis=1)


# ----------------------------------------------------------------------------
# Deterministic synthetic parameter init (mirrors module __init__ shapes)
# ----------------------------------------------------------------------------
def init_params(key, feature_num, field_num, emb_dim, mlp_dims):
    keys = jax.random.split(key, 3 + 2 * len(mlp_dims))
    embedding = 0.01 * jax.random.normal(keys[0], (feature_num, emb_dim), jnp.float32)

    weights, biases = [], []
    in_dim = field_num * emb_dim
    k = 1
    for out_dim in mlp_dims:
        scale = 1.0 / jnp.sqrt(jnp.float32(in_dim))
        weights.append(scale * jax.random.normal(keys[k], (in_dim, out_dim), jnp.float32))
        biases.append(scale * jax.random.normal(keys[k + 1], (1, out_dim), jnp.float32))
        in_dim = out_dim
        k += 2
    scale = 1.0 / jnp.sqrt(jnp.float32(in_dim))
    head_w = scale * jax.random.normal(keys[k], (1, in_dim), jnp.float32)   # (out=1, in)
    head_b = scale * jax.random.normal(keys[k + 1], (1, 1), jnp.float32)

    return {"embedding": embedding, "weights": weights, "biases": biases,
            "head_w": head_w, "head_b": head_b}


if __name__ == "__main__":
    # Small synthetic config consistent with the module's forward:
    #   data_config:  feature_num=64, field_num=4
    #   model_config: emb_dim=8, mlp_dims=(32, 16), mlp_dropout=0.0, use_bn=False
    feature_num = 64
    field_num = 4
    emb_dim = 8
    mlp_dims = (32, 16)
    batch = 8

    key = jax.random.PRNGKey(0)
    k_params, k_x = jax.random.split(key)

    params = init_params(k_params, feature_num, field_num, emb_dim, mlp_dims)
    x_idx = jax.random.randint(k_x, (batch, field_num), 0, feature_num, dtype=jnp.int32)

    score = dnn_forward(params, x_idx, field_num=field_num, emb_dim=emb_dim)
    score = jax.block_until_ready(score)

    assert score.shape == (batch,), score.shape
    assert score.dtype == jnp.float32, score.dtype

    ref = jax.block_until_ready(
        dnn_reference(params, x_idx, field_num=field_num, emb_dim=emb_dim))
    assert jnp.allclose(score, ref, atol=1e-3, rtol=1e-2), (score, ref)

    print("KERNEL_OK")
</pallas_src>

<mosaic_0001>
module attributes {stable_mosaic.version = 11 : i64} {
  func.func @_fused_dnn_kernel(%arg0: i32, %arg1: memref<8x4xi32, #tpu.memory_space<vmem>>, %arg2: memref<64x8xf32, #tpu.memory_space<vmem>>, %arg3: memref<32x32xf32, #tpu.memory_space<vmem>>, %arg4: memref<1x32xf32, #tpu.memory_space<vmem>>, %arg5: memref<32x16xf32, #tpu.memory_space<vmem>>, %arg6: memref<1x16xf32, #tpu.memory_space<vmem>>, %arg7: memref<1x16xf32, #tpu.memory_space<vmem>>, %arg8: memref<1x1xf32, #tpu.memory_space<vmem>>, %arg9: memref<1x1x8xf32, #tpu.memory_space<vmem>>) attributes {dimension_semantics = [#tpu.dimension_semantics<parallel>], iteration_bounds = array<i64: 1>, scalar_prefetch = 0 : i64, scratch_operands = 0 : i64, tpu.core_type = #tpu.core_type<tc>, window_params = [{transform_indices = @transform_0, window_bounds = array<i64: 8, 4>}, {pipeline_mode = #tpu.pipeline_mode<synchronous>, transform_indices = @transform_1, window_bounds = array<i64: 64, 8>}, {pipeline_mode = #tpu.pipeline_mode<synchronous>, transform_indices = @transform_2, window_bounds = array<i64: 32, 32>}, {pipeline_mode = #tpu.pipeline_mode<synchronous>, transform_indices = @transform_3, window_bounds = array<i64: 1, 32>}, {pipeline_mode = #tpu.pipeline_mode<synchronous>, transform_indices = @transform_4, window_bounds = array<i64: 32, 16>}, {pipeline_mode = #tpu.pipeline_mode<synchronous>, transform_indices = @transform_5, window_bounds = array<i64: 1, 16>}, {pipeline_mode = #tpu.pipeline_mode<synchronous>, transform_indices = @transform_6, window_bounds = array<i64: 1, 16>}, {pipeline_mode = #tpu.pipeline_mode<synchronous>, transform_indices = @transform_7, window_bounds = array<i64: 1, 1>}, {transform_indices = @transform_8, window_bounds = array<i64: 1, 1, 8>}]} {
    %c0 = arith.constant 0 : index
    %c0_0 = arith.constant 0 : index
    %0 = vector.load %arg1[%c0, %c0_0] : memref<8x4xi32, #tpu.memory_space<vmem>>, vector<8x4xi32>
    %c0_1 = arith.constant 0 : index
    %c0_2 = arith.constant 0 : index
    %1 = vector.load %arg2[%c0_1, %c0_2] : memref<64x8xf32, #tpu.memory_space<vmem>>, vector<64x8xf32>
    %c0_3 = arith.constant 0 : index
    %c0_4 = arith.constant 0 : index
    %2 = vector.load %arg3[%c0_3, %c0_4] : memref<32x32xf32, #tpu.memory_space<vmem>>, vector<32x32xf32>
    %c0_5 = arith.constant 0 : index
    %c0_6 = arith.constant 0 : index
    %3 = vector.load %arg4[%c0_5, %c0_6] : memref<1x32xf32, #tpu.memory_space<vmem>>, vector<1x32xf32>
    %4 = tpu.iota {dimensions = array<i32: 1>} : vector<8x64xi32>
    %cst = arith.constant 0.000000e+00 : f32
    %5 = vector.broadcast %cst : f32 to vector<8x32xf32>
    %6 = vector.extract_strided_slice %0 {offsets = [0, 0], sizes = [8, 1], strides = [1, 1]} : vector<8x4xi32> to vector<8x1xi32>
    %7 = vector.broadcast %6 : vector<8x1xi32> to vector<8x64xi32>
    %8 = arith.cmpi eq, %7, %4 : vector<8x64xi32>
    %9 = arith.extui %8 : vector<8x64xi1> to vector<8x64xi32>
    %10 = arith.sitofp %9 : vector<8x64xi32> to vector<8x64xf32>
    %cst_7 = arith.constant dense<0.000000e+00> : vector<8x8xf32>
    %11 = tpu.matmul %10, %1, %cst_7 {dimension_numbers = #tpu.dot_dimension_numbers<[1], [0], [0], [1], [0, 0, 1, 1], [], []>} : vector<8x64xf32>, vector<64x8xf32>, vector<8x8xf32> -> vector<8x8xf32>
    %12 = vector.extract_strided_slice %2 {offsets = [0, 0], sizes = [8, 32], strides = [1, 1]} : vector<32x32xf32> to vector<8x32xf32>
    %cst_8 = arith.constant dense<0.000000e+00> : vector<8x32xf32>
    %13 = tpu.matmul %11, %12, %cst_8 {dimension_numbers = #tpu.dot_dimension_numbers<[1], [0], [0], [1], [0, 0, 1, 1], [], []>} : vector<8x8xf32>, vector<8x32xf32>, vector<8x32xf32> -> vector<8x32xf32>
    %14 = arith.addf %5, %13 : vector<8x32xf32>
    %15 = vector.extract_strided_slice %0 {offsets = [0, 1], sizes = [8, 1], strides = [1, 1]} : vector<8x4xi32> to vector<8x1xi32>
    %16 = vector.broadcast %15 : vector<8x1xi32> to vector<8x64xi32>
    %17 = arith.cmpi eq, %16, %4 : vector<8x64xi32>
    %18 = arith.extui %17 : vector<8x64xi1> to vector<8x64xi32>
    %19 = arith.sitofp %18 : vector<8x64xi32> to vector<8x64xf32>
    %cst_9 = arith.constant dense<0.000000e+00> : vector<8x8xf32>
    %20 = tpu.matmul %19, %1, %cst_9 {dimension_numbers = #tpu.dot_dimension_numbers<[1], [0], [0], [1], [0, 0, 1, 1], [], []>} : vector<8x64xf32>, vector<64x8xf32>, vector<8x8xf32> -> vector<8x8xf32>
    %21 = vector.extract_strided_slice %2 {offsets = [8, 0], sizes = [8, 32], strides = [1, 1]} : vector<32x32xf32> to vector<8x32xf32>
    %cst_10 = arith.constant dense<0.000000e+00> : vector<8x32xf32>
    %22 = tpu.matmul %20, %21, %cst_10 {dimension_numbers = #tpu.dot_dimension_numbers<[1], [0], [0], [1], [0, 0, 1, 1], [], []>} : vector<8x8xf32>, vector<8x32xf32>, vector<8x32xf32> -> vector<8x32xf32>
    %23 = arith.addf %14, %22 : vector<8x32xf32>
    %24 = vector.extract_strided_slice %0 {offsets = [0, 2], sizes = [8, 1], strides = [1, 1]} : vector<8x4xi32> to vector<8x1xi32>
    %25 = vector.broadcast %24 : vector<8x1xi32> to vector<8x64xi32>
    %26 = arith.cmpi eq, %25, %4 : vector<8x64xi32>
    %27 = arith.extui %26 : vector<8x64xi1> to vector<8x64xi32>
    %28 = arith.sitofp %27 : vector<8x64xi32> to vector<8x64xf32>
    %cst_11 = arith.constant dense<0.000000e+00> : vector<8x8xf32>
    %29 = tpu.matmul %28, %1, %cst_11 {dimension_numbers = #tpu.dot_dimension_numbers<[1], [0], [0], [1], [0, 0, 1, 1], [], []>} : vector<8x64xf32>, vector<64x8xf32>, vector<8x8xf32> -> vector<8x8xf32>
    %30 = vector.extract_strided_slice %2 {offsets = [16, 0], sizes = [8, 32], strides = [1, 1]} : vector<32x32xf32> to vector<8x32xf32>
    %cst_12 = arith.constant dense<0.000000e+00> : vector<8x32xf32>
    %31 = tpu.matmul %29, %30, %cst_12 {dimension_numbers = #tpu.dot_dimension_numbers<[1], [0], [0], [1], [0, 0, 1, 1], [], []>} : vector<8x8xf32>, vector<8x32xf32>, vector<8x32xf32> -> vector<8x32xf32>
    %32 = arith.addf %23, %31 : vector<8x32xf32>
    %33 = vector.extract_strided_slice %0 {offsets = [0, 3], sizes = [8, 1], strides = [1, 1]} : vector<8x4xi32> to vector<8x1xi32>
    %34 = vector.broadcast %33 : vector<8x1xi32> to vector<8x64xi32>
    %35 = arith.cmpi eq, %34, %4 : vector<8x64xi32>
    %36 = arith.extui %35 : vector<8x64xi1> to vector<8x64xi32>
    %37 = arith.sitofp %36 : vector<8x64xi32> to vector<8x64xf32>
    %cst_13 = arith.constant dense<0.000000e+00> : vector<8x8xf32>
    %38 = tpu.matmul %37, %1, %cst_13 {dimension_numbers = #tpu.dot_dimension_numbers<[1], [0], [0], [1], [0, 0, 1, 1], [], []>} : vector<8x64xf32>, vector<64x8xf32>, vector<8x8xf32> -> vector<8x8xf32>
    %39 = vector.extract_strided_slice %2 {offsets = [24, 0], sizes = [8, 32], strides = [1, 1]} : vector<32x32xf32> to vector<8x32xf32>
    %cst_14 = arith.constant dense<0.000000e+00> : vector<8x32xf32>
    %40 = tpu.matmul %38, %39, %cst_14 {dimension_numbers = #tpu.dot_dimension_numbers<[1], [0], [0], [1], [0, 0, 1, 1], [], []>} : vector<8x8xf32>, vector<8x32xf32>, vector<8x32xf32> -> vector<8x32xf32>
    %41 = arith.addf %32, %40 : vector<8x32xf32>
    %42 = vector.broadcast %3 : vector<1x32xf32> to vector<8x32xf32>
    %43 = arith.addf %41, %42 : vector<8x32xf32>
    %cst_15 = arith.constant 0.000000e+00 : f32
    %44 = vector.broadcast %cst_15 : f32 to vector<8x32xf32>
    %45 = arith.maximumf %43, %44 : vector<8x32xf32>
    %c0_16 = arith.constant 0 : index
    %c0_17 = arith.constant 0 : index
    %46 = vector.load %arg5[%c0_16, %c0_17] : memref<32x16xf32, #tpu.memory_space<vmem>>, vector<32x16xf32>
    %c0_18 = arith.constant 0 : index
    %c0_19 = arith.constant 0 : index
    %47 = vector.load %arg6[%c0_18, %c0_19] : memref<1x16xf32, #tpu.memory_space<vmem>>, vector<1x16xf32>
    %cst_20 = arith.constant dense<0.000000e+00> : vector<8x16xf32>
    %48 = tpu.matmul %45, %46, %cst_20 {dimension_numbers = #tpu.dot_dimension_numbers<[1], [0], [0], [1], [0, 0, 1, 1], [], []>} : vector<8x32xf32>, vector<32x16xf32>, vector<8x16xf32> -> vector<8x16xf32>
    %49 = vector.broadcast %47 : vector<1x16xf32> to vector<8x16xf32>
    %50 = arith.addf %48, %49 : vector<8x16xf32>
    %cst_21 = arith.constant 0.000000e+00 : f32
    %51 = vector.broadcast %cst_21 : f32 to vector<8x16xf32>
    %52 = arith.maximumf %50, %51 : vector<8x16xf32>
    %c0_22 = arith.constant 0 : index
    %c0_23 = arith.constant 0 : index
    %53 = vector.load %arg7[%c0_22, %c0_23] : memref<1x16xf32, #tpu.memory_space<vmem>>, vector<1x16xf32>
    %c0_24 = arith.constant 0 : index
    %c0_25 = arith.constant 0 : index
    %54 = vector.load %arg8[%c0_24, %c0_25] : memref<1x1xf32, #tpu.memory_space<vmem>>, vector<1x1xf32>
    %55 = tpu.transpose %52, [1, 0] : vector<8x16xf32> -> vector<16x8xf32>
    %cst_26 = arith.constant dense<0.000000e+00> : vector<1x8xf32>
    %56 = tpu.matmul %53, %55, %cst_26 {dimension_numbers = #tpu.dot_dimension_numbers<[1], [0], [0], [1], [0, 0, 1, 1], [], []>} : vector<1x16xf32>, vector<16x8xf32>, vector<1x8xf32> -> vector<1x8xf32>
    %57 = vector.broadcast %54 : vector<1x1xf32> to vector<1x8xf32>
    %58 = arith.addf %56, %57 : vector<1x8xf32>
    %59 = vector.shape_cast %58 : vector<1x8xf32> to vector<1x1x8xf32>
    %c0_27 = arith.constant 0 : index
    %c0_28 = arith.constant 0 : index
    %c0_29 = arith.constant 0 : index
    %60 = vector.load %arg9[%c0_27, %c0_28, %c0_29] : memref<1x1x8xf32, #tpu.memory_space<vmem>>, vector<1x1x8xf32>
    tpu.vector_store %arg9[%c0_27, %c0_28, %c0_29], %59 {strides = array<i32>} : memref<1x1x8xf32, #tpu.memory_space<vmem>>, vector<1x1x8xf32>,
    return
  }
  func.func @transform_0(%arg0: i32) -> (i32, i32) {
    %c0_i32 = arith.constant 0 : i32
    %c0_i32_0 = arith.constant 0 : i32
    return %arg0, %c0_i32 : i32, i32
  }
  func.func @transform_1(%arg0: i32) -> (i32, i32) {
    %c0_i32 = arith.constant 0 : i32
    %c0_i32_0 = arith.constant 0 : i32
    %c0_i32_1 = arith.constant 0 : i32
    return %c0_i32, %c0_i32_0 : i32, i32
  }
  func.func @transform_2(%arg0: i32) -> (i32, i32) {
    %c0_i32 = arith.constant 0 : i32
    %c0_i32_0 = arith.constant 0 : i32
    %c0_i32_1 = arith.constant 0 : i32
    return %c0_i32, %c0_i32_0 : i32, i32
  }
  func.func @transform_3(%arg0: i32) -> (i32, i32) {
    %c0_i32 = arith.constant 0 : i32
    %c0_i32_0 = arith.constant 0 : i32
    %c0_i32_1 = arith.constant 0 : i32
    return %c0_i32, %c0_i32_0 : i32, i32
  }
  func.func @transform_4(%arg0: i32) -> (i32, i32) {
    %c0_i32 = arith.constant 0 : i32
    %c0_i32_0 = arith.constant 0 : i32
    %c0_i32_1 = arith.constant 0 : i32
    return %c0_i32, %c0_i32_0 : i32, i32
  }
  func.func @transform_5(%arg0: i32) -> (i32, i32) {
    %c0_i32 = arith.constant 0 : i32
    %c0_i32_0 = arith.constant 0 : i32
    %c0_i32_1 = arith.constant 0 : i32
    return %c0_i32, %c0_i32_0 : i32, i32
  }
  func.func @transform_6(%arg0: i32) -> (i32, i32) {
    %c0_i32 = arith.constant 0 : i32
    %c0_i32_0 = arith.constant 0 : i32
    %c0_i32_1 = arith.constant 0 : i32
    return %c0_i32, %c0_i32_0 : i32, i32
  }
  func.func @transform_7(%arg0: i32) -> (i32, i32) {
    %c0_i32 = arith.constant 0 : i32
    %c0_i32_0 = arith.constant 0 : i32
    %c0_i32_1 = arith.constant 0 : i32
    return %c0_i32, %c0_i32_0 : i32, i32
  }
  func.func @transform_8(%arg0: i32) -> (i32, i32, i32) {
    %c0_i32 = arith.constant 0 : i32
    %c0_i32_0 = arith.constant 0 : i32
    %c0_i32_1 = arith.constant 0 : i32
    return %arg0, %c0_i32, %c0_i32_0 : i32, i32, i32
  }
}

</mosaic_0001>

<llo_original>
// kernel: tpu_custom_call.1
$region0: #{tpu_custom_call.1}
  #allocation0 [shape = 'u32[]', space=smem, size = 0x4, offset = 0x4, fixed_abs, tag = 'smem constant byte address 0x4 - core index']
  #allocation1 [shape = 'u32[144,128]{1,0:T(1,128)}', space=vmem, size = 0x12000, scoped, tag = 'internal scratch']
  #allocation2 [shape = 'f32[1,1]{1,0:T(1,128)S(1)}', space=vmem, size = 0x200, scoped, tag = 'scoped memory for tpu_custom_call.1']
  %s0 = inlined_call_operand.vmem [shape: s32[8,4], index: 0, kind: input, shape index: {}]
  %s1 = inlined_call_operand.vmem [shape: f32[64,8], index: 1, kind: input, shape index: {}]
  %s2 = inlined_call_operand.vmem [shape: f32[32,32], index: 2, kind: input, shape index: {}]
  %s3 = inlined_call_operand.vmem [shape: f32[1,32], index: 3, kind: input, shape index: {}]
  %s4 = inlined_call_operand.vmem [shape: f32[32,16], index: 4, kind: input, shape index: {}]
  %s5 = inlined_call_operand.vmem [shape: f32[1,16], index: 5, kind: input, shape index: {}]
  %s6 = inlined_call_operand.vmem [shape: f32[1,16], index: 6, kind: input, shape index: {}]
  %s7 = inlined_call_operand.<no memory space> [shape: f32[1,1], index: 7, kind: input, shape index: {}]
  %s8 = inlined_call_operand.hbm [shape: f32[1,1,8], index: 8, kind: output, shape index: {}]
  %s9 = sld [smem:[#allocation0]]
  $region42: #{tpu_custom_call.1} parent=0
    _
  %s11 = ssub.s32 1, %s9
  %s12 = scalar_select 0, %s11, %s9
  %v13 = vstv %s7
  %14 = vst [vmem:[#allocation2] sm:$0x1] %v13
  $region1: #{tpu_custom_call.1} parent=0
    #allocation3 [shape = 'u8[512]{0}', space=vmem, size = 0x400, scoped, tag = 'output window, operand 0, single buffered']
    #allocation4 [shape = 's32[1]{0}', space=sflag, size = 0x4, scoped, tag = 'scoped memory for tpu_custom_call.1']
    %15 = vsyncpa [#allocation4], 0
    // Predicated region
    $region2: #{tpu_custom_call.1} parent=1 // pred_check
      _
    $region3: #{tpu_custom_call.1} parent=1 // pred_check_branch
      %17 = sbr.rel (0) target = $region5
    $region4: #{tpu_custom_call.1} parent=1 // pred_region
      _
    $region5: #{tpu_custom_call.1} parent=1 // pred_fallthru
      _
    // Predicated region
    $region6: #{tpu_custom_call.1} parent=1 // pred_check
      _
    $region7: #{tpu_custom_call.1} parent=1 // pred_check_branch
      %19 = sbr.rel (0) target = $region9
    $region8: #{tpu_custom_call.1} parent=1 // pred_region
      _
    $region9: #{tpu_custom_call.1} parent=1 // pred_fallthru
      _
    // Predicated region
    $region10: #{tpu_custom_call.1} parent=1 // pred_check
      _
    $region11: #{tpu_custom_call.1} parent=1 // pred_check_branch
      %21 = sbr.rel (0) target = $region13
    $region12: #{tpu_custom_call.1} parent=1 // pred_region
      _
    $region13: #{tpu_custom_call.1} parent=1 // pred_fallthru
      _
    // Predicated region
    $region14: #{tpu_custom_call.1} parent=1 // pred_check
      _
    $region15: #{tpu_custom_call.1} parent=1 // pred_check_branch
      %23 = sbr.rel (0) target = $region17
    $region16: #{tpu_custom_call.1} parent=1 // pred_region
      _
    $region17: #{tpu_custom_call.1} parent=1 // pred_fallthru
      _
    // Predicated region
    $region18: #{tpu_custom_call.1} parent=1 // pred_check
      _
    $region19: #{tpu_custom_call.1} parent=1 // pred_check_branch
      %25 = sbr.rel (0) target = $region21
    $region20: #{tpu_custom_call.1} parent=1 // pred_region
      _
    $region21: #{tpu_custom_call.1} parent=1 // pred_fallthru
      _
    // Predicated region
    $region22: #{tpu_custom_call.1} parent=1 // pred_check
      _
    $region23: #{tpu_custom_call.1} parent=1 // pred_check_branch
      %27 = sbr.rel (0) target = $region25
    $region24: #{tpu_custom_call.1} parent=1 // pred_region
      _
    $region25: #{tpu_custom_call.1} parent=1 // pred_fallthru
      _
    // Predicated region
    $region26: #{tpu_custom_call.1} parent=1 // pred_check
      _
    $region27: #{tpu_custom_call.1} parent=1 // pred_check_branch
      %29 = sbr.rel (0) target = $region29
    $region28: #{tpu_custom_call.1} parent=1 // pred_region
      _
    $region29: #{tpu_custom_call.1} parent=1 // pred_fallthru
      _
    // Predicated region
    $region30: #{tpu_custom_call.1} parent=1 // pred_check
      _
    $region31: #{tpu_custom_call.1} parent=1 // pred_check_branch
      %31 = sbr.rel (0) target = $region33
    $region32: #{tpu_custom_call.1} parent=1 // pred_region
      _
    $region33: #{tpu_custom_call.1} parent=1 // pred_fallthru
      _
    %v32 = vld [vmem:[%s0] sm:$0xff]
    %v33 = vld [vmem:[%s1] sm:$0xff]
    %v34 = vld [vmem:[%s1 + $0x8] sm:$0xff]
    %v35 = vld [vmem:[%s1 + $0x10] sm:$0xff]
    %v36 = vld [vmem:[%s1 + $0x18] sm:$0xff]
    %v37 = vld [vmem:[%s1 + $0x20] sm:$0xff]
    %v38 = vld [vmem:[%s1 + $0x28] sm:$0xff]
    %v39 = vld [vmem:[%s1 + $0x30] sm:$0xff]
    %v40 = vld [vmem:[%s1 + $0x38] sm:$0xff]
    %v41 = vld [vmem:[%s2] sm:$0xff]
    %v42 = vld [vmem:[%s2 + $0x8] sm:$0xff]
    %v43 = vld [vmem:[%s2 + $0x10] sm:$0xff]
    %v44 = vld [vmem:[%s2 + $0x18] sm:$0xff]
    %v45 = vld [vmem:[%s3] sm:$0x1]
    %v46 = vlaneseq
    %v47 = vand.u32 %v46, 127
    %48 = vset.pattern.permute.xlu0 0
    %49 = vperm.xlu0 %48, %v32
    %v50 = vpop.permute.xlu0 %49
    %vm51 = vcmp.eq.s32.totalorder %v50, %v47
    %v52 = vsel %vm51, 1, 0
    %v53 = vcvt.s32.f32 %v52
    %vm54 = vcmask 523264
    %v56 = vsel %vm54, %v53, 0
    %58 = vmatprep.subr.mxu0 0.0
    %59 = vmatpush1.msra.mxu0 %v33
    %60 = vmatprep.subr.mxu0 0.0
    %61 = vmatpush1.msra.mxu0 %v34
    %62 = vmatprep.subr.mxu0 0.0
    %63 = vmatpush1.msra.mxu0 %v35
    %64 = vmatprep.subr.mxu0 0.0
    %65 = vmatpush1.msra.mxu0 %v36
    %66 = vmatprep.subr.mxu0 0.0
    %67 = vmatpush1.msra.mxu0 %v37
    %68 = vmatprep.subr.mxu0 0.0
    %69 = vmatpush1.msra.mxu0 %v38
    %70 = vmatprep.subr.mxu0 0.0
    %71 = vmatpush1.msra.mxu0 %v39
    %72 = vmatprep.subr.mxu0 0.0
    %73 = vmatpush1.msra.mxu0 %v40
    %74 = vmatprep.subr.mxu0 0.0
    %75 = vmatpush1.msra.mxu0 0.0
    %76 = vmatprep.subr.mxu0 0.0
    %77 = vmatpush1.msra.mxu0 0.0
    %78 = vmatprep.subr.mxu0 0.0
    %79 = vmatpush1.msra.mxu0 0.0
    %80 = vmatprep.subr.mxu0 0.0
    %81 = vmatpush1.msra.mxu0 0.0
    %82 = vmatprep.subr.mxu0 0.0
    %83 = vmatpush1.msra.mxu0 0.0
    %84 = vmatprep.subr.mxu0 0.0
    %85 = vmatpush1.msra.mxu0 0.0
    %86 = vmatprep.subr.mxu0 0.0
    %87 = vmatpush1.msra.mxu0 0.0
    %88 = vmatprep.subr.mxu0 0.0
    %89 = vmatpush1.msra.mxu0 0.0
    %90 = vmatprep.subr.mxu0 0.0
    %91 = vmatpush1.msra.mxu0 0.0
    %92 = vmatprep.subr.mxu0 0.0
    %93 = vmatpush1.msra.mxu0 0.0
    %94 = vmatprep.subr.mxu0 0.0
    %95 = vmatpush1.msra.mxu0 0.0
    %96 = vmatprep.subr.mxu0 0.0
    %97 = vmatpush1.msra.mxu0 0.0
    %98 = vmatprep.subr.mxu0 0.0
    %99 = vmatpush1.msra.mxu0 0.0
    %100 = vmatprep.subr.mxu0 0.0
    %101 = vmatpush1.msra.mxu0 0.0
    %102 = vmatprep.subr.mxu0 0.0
    %103 = vmatpush1.msra.mxu0 0.0
    %104 = vmatprep.subr.mxu0 0.0
    %105 = vmatpush1.msra.mxu0 0.0
    %106 = vmatprep.subr.mxu0 0.0
    %107 = vmatpush1.msra.mxu0 0.0
    %108 = vmatprep.subr.mxu0 0.0
    %109 = vmatpush1.msra.mxu0 0.0
    %110 = vmatprep.subr.mxu0 0.0
    %111 = vmatpush1.msra.mxu0 0.0
    %112 = vmatprep.subr.mxu0 0.0
    %113 = vmatpush1.msra.mxu0 0.0
    %114 = vmatprep.subr.mxu0 0.0
    %115 = vmatpush1.msra.mxu0 0.0
    %116 = vmatprep.subr.mxu0 0.0
    %117 = vmatpush1.msra.mxu0 0.0
    %118 = vmatprep.subr.mxu0 0.0
    %119 = vmatpush1.msra.mxu0 0.0
    %120 = vmatprep.subr.mxu0 0.0
    %121 = vmatpush1.msra.mxu0 0.0
    %122 = vmatprep.mubr.f32.mxu0 0.0
    %123 = vmatmul.mubr.f32.gmra.mrb[0].mxu0 %v56
    %v124 = vpop.f32.mrb[0].mxu0
    %v125 = vadd.f32 0.0, %v124
    %v126 = vpop.f32.mrb[0].mxu0
    %127 = vdwg.mxu0
    %128 = vset.pattern.permute.xlu0 1
    %129 = vperm.xlu0 %128, %v32
    %v130 = vpop.permute.xlu0 %129
    %vm131 = vcmp.eq.s32.totalorder %v130, %v47
    %v132 = vsel %vm131, 1, 0
    %v133 = vcvt.s32.f32 %v132
    %v135 = vsel %vm54, %v133, 0
    %137 = vmatprep.subr.mxu0 0.0
    %138 = vmatpush1.msra.mxu0 %v33
    %139 = vmatprep.subr.mxu0 0.0
    %140 = vmatpush1.msra.mxu0 %v34
    %141 = vmatprep.subr.mxu0 0.0
    %142 = vmatpush1.msra.mxu0 %v35
    %143 = vmatprep.subr.mxu0 0.0
    %144 = vmatpush1.msra.mxu0 %v36
    %145 = vmatprep.subr.mxu0 0.0
    %146 = vmatpush1.msra.mxu0 %v37
    %147 = vmatprep.subr.mxu0 0.0
    %148 = vmatpush1.msra.mxu0 %v38
    %149 = vmatprep.subr.mxu0 0.0
    %150 = vmatpush1.msra.mxu0 %v39
    %151 = vmatprep.subr.mxu0 0.0
    %152 = vmatpush1.msra.mxu0 %v40
    %153 = vmatprep.subr.mxu0 0.0
    %154 = vmatpush1.msra.mxu0 0.0
    %155 = vmatprep.subr.mxu0 0.0
    %156 = vmatpush1.msra.mxu0 0.0
    %157 = vmatprep.subr.mxu0 0.0
    %158 = vmatpush1.msra.mxu0 0.0
    %159 = vmatprep.subr.mxu0 0.0
    %160 = vmatpush1.msra.mxu0 0.0
    %161 = vmatprep.subr.mxu0 0.0
    %162 = vmatpush1.msra.mxu0 0.0
    %163 = vmatprep.subr.mxu0 0.0
    %164 = vmatpush1.msra.mxu0 0.0
    %165 = vmatprep.subr.mxu0 0.0
    %166 = vmatpush1.msra.mxu0 0.0
    %167 = vmatprep.subr.mxu0 0.0
    %168 = vmatpush1.msra.mxu0 0.0
    %169 = vmatprep.subr.mxu0 0.0
    %170 = vmatpush1.msra.mxu0 0.0
    %171 = vmatprep.subr.mxu0 0.0
    %172 = vmatpush1.msra.mxu0 0.0
    %173 = vmatprep.subr.mxu0 0.0
    %174 = vmatpush1.msra.mxu0 0.0
    %175 = vmatprep.subr.mxu0 0.0
    %176 = vmatpush1.msra.mxu0 0.0
    %177 = vmatprep.subr.mxu0 0.0
    %178 = vmatpush1.msra.mxu0 0.0
    %179 = vmatprep.subr.mxu0 0.0
    %180 = vmatpush1.msra.mxu0 0.0
    %181 = vmatprep.subr.mxu0 0.0
    %182 = vmatpush1.msra.mxu0 0.0
    %183 = vmatprep.subr.mxu0 0.0
    %184 = vmatpush1.msra.mxu0 0.0
    %185 = vmatprep.subr.mxu0 0.0
    %186 = vmatpush1.msra.mxu0 0.0
    %187 = vmatprep.subr.mxu0 0.0
    %188 = vmatpush1.msra.mxu0 0.0
    %189 = vmatprep.subr.mxu0 0.0
    %190 = vmatpush1.msra.mxu0 0.0
    %191 = vmatprep.subr.mxu0 0.0
    %192 = vmatpush1.msra.mxu0 0.0
    %193 = vmatprep.subr.mxu0 0.0
    %194 = vmatpush1.msra.mxu0 0.0
    %195 = vmatprep.subr.mxu0 0.0
    %196 = vmatpush1.msra.mxu0 0.0
    %197 = vmatprep.subr.mxu0 0.0
    %198 = vmatpush1.msra.mxu0 0.0
    %199 = vmatprep.subr.mxu0 0.0
    %200 = vmatpush1.msra.mxu0 0.0
    %201 = vmatprep.mubr.f32.mxu0 0.0
    %202 = vmatmul.mubr.f32.gmra.mrb[0].mxu0 %v135
    %v203 = vpop.f32.mrb[0].mxu0
    %v204 = vadd.f32 0.0, %v203
    %v205 = vpop.f32.mrb[0].mxu0
    %206 = vdwg.mxu0
    %vm207 = vcmask 64512
    %v209 = vsel %vm207, %v204, 0
    %211 = vmatprep.subr.mxu0 0.0
    %212 = vmatpush1.msra.mxu0 %v42
    %213 = vmatprep.subr.mxu0 0.0
    %214 = vmatpush1.msra.mxu0 0.0
    %215 = vmatprep.subr.mxu0 0.0
    %216 = vmatpush1.msra.mxu0 0.0
    %217 = vmatprep.subr.mxu0 0.0
    %218 = vmatpush1.msra.mxu0 0.0
    %219 = vmatprep.subr.mxu0 0.0
    %220 = vmatpush1.msra.mxu0 0.0
    %221 = vmatprep.subr.mxu0 0.0
    %222 = vmatpush1.msra.mxu0 0.0
    %223 = vmatprep.subr.mxu0 0.0
    %224 = vmatpush1.msra.mxu0 0.0
    %225 = vmatprep.subr.mxu0 0.0
    %226 = vmatpush1.msra.mxu0 0.0
    %227 = vmatprep.subr.mxu0 0.0
    %228 = vmatpush1.msra.mxu0 0.0
    %229 = vmatprep.subr.mxu0 0.0
    %230 = vmatpush1.msra.mxu0 0.0
    %231 = vmatprep.subr.mxu0 0.0
    %232 = vmatpush1.msra.mxu0 0.0
    %233 = vmatprep.subr.mxu0 0.0
    %234 = vmatpush1.msra.mxu0 0.0
    %235 = vmatprep.subr.mxu0 0.0
    %236 = vmatpush1.msra.mxu0 0.0
    %237 = vmatprep.subr.mxu0 0.0
    %238 = vmatpush1.msra.mxu0 0.0
    %239 = vmatprep.subr.mxu0 0.0
    %240 = vmatpush1.msra.mxu0 0.0
    %241 = vmatprep.subr.mxu0 0.0
    %242 = vmatpush1.msra.mxu0 0.0
    %243 = vmatprep.subr.mxu0 0.0
    %244 = vmatpush1.msra.mxu0 0.0
    %245 = vmatprep.subr.mxu0 0.0
    %246 = vmatpush1.msra.mxu0 0.0
    %247 = vmatprep.subr.mxu0 0.0
    %248 = vmatpush1.msra.mxu0 0.0
    %249 = vmatprep.subr.mxu0 0.0
    %250 = vmatpush1.msra.mxu0 0.0
    %251 = vmatprep.subr.mxu0 0.0
    %252 = vmatpush1.msra.mxu0 0.0
    %253 = vmatprep.subr.mxu0 0.0
    %254 = vmatpush1.msra.mxu0 0.0
    %255 = vmatprep.subr.mxu0 0.0
    %256 = vmatpush1.msra.mxu0 0.0
    %257 = vmatprep.subr.mxu0 0.0
    %258 = vmatpush1.msra.mxu0 0.0
    %259 = vmatprep.subr.mxu0 0.0
    %260 = vmatpush1.msra.mxu0 0.0
    %261 = vmatprep.subr.mxu0 0.0
    %262 = vmatpush1.msra.mxu0 0.0
    %263 = vmatprep.subr.mxu0 0.0
    %264 = vmatpush1.msra.mxu0 0.0
    %265 = vmatprep.subr.mxu0 0.0
    %266 = vmatpush1.msra.mxu0 0.0
    %267 = vmatprep.subr.mxu0 0.0
    %268 = vmatpush1.msra.mxu0 0.0
    %269 = vmatprep.subr.mxu0 0.0
    %270 = vmatpush1.msra.mxu0 0.0
    %271 = vmatprep.subr.mxu0 0.0
    %272 = vmatpush1.msra.mxu0 0.0
    %273 = vmatprep.subr.mxu0 0.0
    %274 = vmatpush1.msra.mxu0 0.0
    %275 = vmatprep.mubr.f32.mxu0 0.0
    %276 = vmatmul.mubr.f32.gmra.mrb[0].mxu0 %v209
    %v277 = vpop.f32.mrb[0].mxu0
    %v278 = vadd.f32 0.0, %v277
    %v279 = vpop.f32.mrb[0].mxu0
    %280 = vdwg.mxu0
    %v282 = vsel %vm207, %v125, 0
    %284 = vmatprep.subr.mxu0 0.0
    %285 = vmatpush1.msra.mxu0 %v41
    %286 = vmatprep.subr.mxu0 0.0
    %287 = vmatpush1.msra.mxu0 0.0
    %288 = vmatprep.subr.mxu0 0.0
    %289 = vmatpush1.msra.mxu0 0.0
    %290 = vmatprep.subr.mxu0 0.0
    %291 = vmatpush1.msra.mxu0 0.0
    %292 = vmatprep.subr.mxu0 0.0
    %293 = vmatpush1.msra.mxu0 0.0
    %294 = vmatprep.subr.mxu0 0.0
    %295 = vmatpush1.msra.mxu0 0.0
    %296 = vmatprep.subr.mxu0 0.0
    %297 = vmatpush1.msra.mxu0 0.0
    %298 = vmatprep.subr.mxu0 0.0
    %299 = vmatpush1.msra.mxu0 0.0
    %300 = vmatprep.subr.mxu0 0.0
    %301 = vmatpush1.msra.mxu0 0.0
    %302 = vmatprep.subr.mxu0 0.0
    %303 = vmatpush1.msra.mxu0 0.0
    %304 = vmatprep.subr.mxu0 0.0
    %305 = vmatpush1.msra.mxu0 0.0
    %306 = vmatprep.subr.mxu0 0.0
    %307 = vmatpush1.msra.mxu0 0.0
    %308 = vmatprep.subr.mxu0 0.0
    %309 = vmatpush1.msra.mxu0 0.0
    %310 = vmatprep.subr.mxu0 0.0
    %311 = vmatpush1.msra.mxu0 0.0
    %312 = vmatprep.subr.mxu0 0.0
    %313 = vmatpush1.msra.mxu0 0.0
    %314 = vmatprep.subr.mxu0 0.0
    %315 = vmatpush1.msra.mxu0 0.0
    %316 = vmatprep.subr.mxu0 0.0
    %317 = vmatpush1.msra.mxu0 0.0
    %318 = vmatprep.subr.mxu0 0.0
    %319 = vmatpush1.msra.mxu0 0.0
    %320 = vmatprep.subr.mxu0 0.0
    %321 = vmatpush1.msra.mxu0 0.0
    %322 = vmatprep.subr.mxu0 0.0
    %323 = vmatpush1.msra.mxu0 0.0
    %324 = vmatprep.subr.mxu0 0.0
    %325 = vmatpush1.msra.mxu0 0.0
    %326 = vmatprep.subr.mxu0 0.0
    %327 = vmatpush1.msra.mxu0 0.0
    %328 = vmatprep.subr.mxu0 0.0
    %329 = vmatpush1.msra.mxu0 0.0
    %330 = vmatprep.subr.mxu0 0.0
    %331 = vmatpush1.msra.mxu0 0.0
    %332 = vmatprep.subr.mxu0 0.0
    %333 = vmatpush1.msra.mxu0 0.0
    %334 = vmatprep.subr.mxu0 0.0
    %335 = vmatpush1.msra.mxu0 0.0
    %336 = vmatprep.subr.mxu0 0.0
    %337 = vmatpush1.msra.mxu0 0.0
    %338 = vmatprep.subr.mxu0 0.0
    %339 = vmatpush1.msra.mxu0 0.0
    %340 = vmatprep.subr.mxu0 0.0
    %341 = vmatpush1.msra.mxu0 0.0
    %342 = vmatprep.subr.mxu0 0.0
    %343 = vmatpush1.msra.mxu0 0.0
    %344 = vmatprep.subr.mxu0 0.0
    %345 = vmatpush1.msra.mxu0 0.0
    %346 = vmatprep.subr.mxu0 0.0
    %347 = vmatpush1.msra.mxu0 0.0
    %348 = vmatprep.mubr.f32.mxu0 0.0
    %349 = vmatmul.mubr.f32.gmra.mrb[0].mxu0 %v282
    %v350 = vpop.f32.mrb[0].mxu0
    %v351 = vadd.f32 %v278, %v350
    %v352 = vpop.f32.mrb[0].mxu0
    %353 = vdwg.mxu0
    %354 = vset.pattern.permute.xlu0 2
    %355 = vperm.xlu0 %354, %v32
    %v356 = vpop.permute.xlu0 %355
    %vm357 = vcmp.eq.s32.totalorder %v356, %v47
    %v358 = vsel %vm357, 1, 0
    %v359 = vcvt.s32.f32 %v358
    %v361 = vsel %vm54, %v359, 0
    %363 = vmatprep.subr.mxu0 0.0
    %364 = vmatpush1.msra.mxu0 %v33
    %365 = vmatprep.subr.mxu0 0.0
    %366 = vmatpush1.msra.mxu0 %v34
    %367 = vmatprep.subr.mxu0 0.0
    %368 = vmatpush1.msra.mxu0 %v35
    %369 = vmatprep.subr.mxu0 0.0
    %370 = vmatpush1.msra.mxu0 %v36
    %371 = vmatprep.subr.mxu0 0.0
    %372 = vmatpush1.msra.mxu0 %v37
    %373 = vmatprep.subr.mxu0 0.0
    %374 = vmatpush1.msra.mxu0 %v38
    %375 = vmatprep.subr.mxu0 0.0
    %376 = vmatpush1.msra.mxu0 %v39
    %377 = vmatprep.subr.mxu0 0.0
    %378 = vmatpush1.msra.mxu0 %v40
    %379 = vmatprep.subr.mxu0 0.0
    %380 = vmatpush1.msra.mxu0 0.0
    %381 = vmatprep.subr.mxu0 0.0
    %382 = vmatpush1.msra.mxu0 0.0
    %383 = vmatprep.subr.mxu0 0.0
    %384 = vmatpush1.msra.mxu0 0.0
    %385 = vmatprep.subr.mxu0 0.0
    %386 = vmatpush1.msra.mxu0 0.0
    %387 = vmatprep.subr.mxu0 0.0
    %388 = vmatpush1.msra.mxu0 0.0
    %389 = vmatprep.subr.mxu0 0.0
    %390 = vmatpush1.msra.mxu0 0.0
    %391 = vmatprep.subr.mxu0 0.0
    %392 = vmatpush1.msra.mxu0 0.0
    %393 = vmatprep.subr.mxu0 0.0
    %394 = vmatpush1.msra.mxu0 0.0
    %395 = vmatprep.subr.mxu0 0.0
    %396 = vmatpush1.msra.mxu0 0.0
    %397 = vmatprep.subr.mxu0 0.0
    %398 = vmatpush1.msra.mxu0 0.0
    %399 = vmatprep.subr.mxu0 0.0
    %400 = vmatpush1.msra.mxu0 0.0
    %401 = vmatprep.subr.mxu0 0.0
    %402 = vmatpush1.msra.mxu0 0.0
    %403 = vmatprep.subr.mxu0 0.0
    %404 = vmatpush1.msra.mxu0 0.0
    %405 = vmatprep.subr.mxu0 0.0
    %406 = vmatpush1.msra.mxu0 0.0
    %407 = vmatprep.subr.mxu0 0.0
    %408 = vmatpush1.msra.mxu0 0.0
    %409 = vmatprep.subr.mxu0 0.0
    %410 = vmatpush1.msra.mxu0 0.0
    %411 = vmatprep.subr.mxu0 0.0
    %412 = vmatpush1.msra.mxu0 0.0
    %413 = vmatprep.subr.mxu0 0.0
    %414 = vmatpush1.msra.mxu0 0.0
    %415 = vmatprep.subr.mxu0 0.0
    %416 = vmatpush1.msra.mxu0 0.0
    %417 = vmatprep.subr.mxu0 0.0
    %418 = vmatpush1.msra.mxu0 0.0
    %419 = vmatprep.subr.mxu0 0.0
    %420 = vmatpush1.msra.mxu0 0.0
    %421 = vmatprep.subr.mxu0 0.0
    %422 = vmatpush1.msra.mxu0 0.0
    %423 = vmatprep.subr.mxu0 0.0
    %424 = vmatpush1.msra.mxu0 0.0
    %425 = vmatprep.subr.mxu0 0.0
    %426 = vmatpush1.msra.mxu0 0.0
    %427 = vmatprep.mubr.f32.mxu0 0.0
    %428 = vmatmul.mubr.f32.gmra.mrb[0].mxu0 %v361
    %v429 = vpop.f32.mrb[0].mxu0
    %v430 = vadd.f32 0.0, %v429
    %v431 = vpop.f32.mrb[0].mxu0
    %432 = vdwg.mxu0
    %v434 = vsel %vm207, %v430, 0
    %436 = vmatprep.subr.mxu0 0.0
    %437 = vmatpush1.msra.mxu0 %v43
    %438 = vmatprep.subr.mxu0 0.0
    %439 = vmatpush1.msra.mxu0 0.0
    %440 = vmatprep.subr.mxu0 0.0
    %441 = vmatpush1.msra.mxu0 0.0
    %442 = vmatprep.subr.mxu0 0.0
    %443 = vmatpush1.msra.mxu0 0.0
    %444 = vmatprep.subr.mxu0 0.0
    %445 = vmatpush1.msra.mxu0 0.0
    %446 = vmatprep.subr.mxu0 0.0
    %447 = vmatpush1.msra.mxu0 0.0
    %448 = vmatprep.subr.mxu0 0.0
    %449 = vmatpush1.msra.mxu0 0.0
    %450 = vmatprep.subr.mxu0 0.0
    %451 = vmatpush1.msra.mxu0 0.0
    %452 = vmatprep.subr.mxu0 0.0
    %453 = vmatpush1.msra.mxu0 0.0
    %454 = vmatprep.subr.mxu0 0.0
    %455 = vmatpush1.msra.mxu0 0.0
    %456 = vmatprep.subr.mxu0 0.0
    %457 = vmatpush1.msra.mxu0 0.0
    %458 = vmatprep.subr.mxu0 0.0
    %459 = vmatpush1.msra.mxu0 0.0
    %460 = vmatprep.subr.mxu0 0.0
    %461 = vmatpush1.msra.mxu0 0.0
    %462 = vmatprep.subr.mxu0 0.0
    %463 = vmatpush1.msra.mxu0 0.0
    %464 = vmatprep.subr.mxu0 0.0
    %465 = vmatpush1.msra.mxu0 0.0
    %466 = vmatprep.subr.mxu0 0.0
    %467 = vmatpush1.msra.mxu0 0.0
    %468 = vmatprep.subr.mxu0 0.0
    %469 = vmatpush1.msra.mxu0 0.0
    %470 = vmatprep.subr.mxu0 0.0
    %471 = vmatpush1.msra.mxu0 0.0
    %472 = vmatprep.subr.mxu0 0.0
    %473 = vmatpush1.msra.mxu0 0.0
    %474 = vmatprep.subr.mxu0 0.0
    %475 = vmatpush1.msra.mxu0 0.0
    %476 = vmatprep.subr.mxu0 0.0
    %477 = vmatpush1.msra.mxu0 0.0
    %478 = vmatprep.subr.mxu0 0.0
    %479 = vmatpush1.msra.mxu0 0.0
    %480 = vmatprep.subr.mxu0 0.0
    %481 = vmatpush1.msra.mxu0 0.0
    %482 = vmatprep.subr.mxu0 0.0
    %483 = vmatpush1.msra.mxu0 0.0
    %484 = vmatprep.subr.mxu0 0.0
    %485 = vmatpush1.msra.mxu0 0.0
    %486 = vmatprep.subr.mxu0 0.0
    %487 = vmatpush1.msra.mxu0 0.0
    %488 = vmatprep.subr.mxu0 0.0
    %489 = vmatpush1.msra.mxu0 0.0
    %490 = vmatprep.subr.mxu0 0.0
    %491 = vmatpush1.msra.mxu0 0.0
    %492 = vmatprep.subr.mxu0 0.0
    %493 = vmatpush1.msra.mxu0 0.0
    %494 = vmatprep.subr.mxu0 0.0
    %495 = vmatpush1.msra.mxu0 0.0
    %496 = vmatprep.subr.mxu0 0.0
    %497 = vmatpush1.msra.mxu0 0.0
    %498 = vmatprep.subr.mxu0 0.0
    %499 = vmatpush1.msra.mxu0 0.0
    %500 = vmatprep.mubr.f32.mxu0 0.0
    %501 = vmatmul.mubr.f32.gmra.mrb[0].mxu0 %v434
    %v502 = vpop.f32.mrb[0].mxu0
    %v503 = vadd.f32 0.0, %v502
    %v504 = vpop.f32.mrb[0].mxu0
    %505 = vdwg.mxu0
    %v506 = vadd.f32 %v351, %v503
    %507 = vset.pattern.permute.xlu0 3
    %508 = vperm.xlu0 %507, %v32
    %v509 = vpop.permute.xlu0 %508
    %vm510 = vcmp.eq.s32.totalorder %v509, %v47
    %v511 = vsel %vm510, 1, 0
    %v512 = vcvt.s32.f32 %v511
    %v514 = vsel %vm54, %v512, 0
    %516 = vmatprep.subr.mxu0 0.0
    %517 = vmatpush1.msra.mxu0 %v33
    %518 = vmatprep.subr.mxu0 0.0
    %519 = vmatpush1.msra.mxu0 %v34
    %520 = vmatprep.subr.mxu0 0.0
    %521 = vmatpush1.msra.mxu0 %v35
    %522 = vmatprep.subr.mxu0 0.0
    %523 = vmatpush1.msra.mxu0 %v36
    %524 = vmatprep.subr.mxu0 0.0
    %525 = vmatpush1.msra.mxu0 %v37
    %526 = vmatprep.subr.mxu0 0.0
    %527 = vmatpush1.msra.mxu0 %v38
    %528 = vmatprep.subr.mxu0 0.0
    %529 = vmatpush1.msra.mxu0 %v39
    %530 = vmatprep.subr.mxu0 0.0
    %531 = vmatpush1.msra.mxu0 %v40
    %532 = vmatprep.subr.mxu0 0.0
    %533 = vmatpush1.msra.mxu0 0.0
    %534 = vmatprep.subr.mxu0 0.0
    %535 = vmatpush1.msra.mxu0 0.0
    %536 = vmatprep.subr.mxu0 0.0
    %537 = vmatpush1.msra.mxu0 0.0
    %538 = vmatprep.subr.mxu0 0.0
    %539 = vmatpush1.msra.mxu0 0.0
    %540 = vmatprep.subr.mxu0 0.0
    %541 = vmatpush1.msra.mxu0 0.0
    %542 = vmatprep.subr.mxu0 0.0
    %543 = vmatpush1.msra.mxu0 0.0
    %544 = vmatprep.subr.mxu0 0.0
    %545 = vmatpush1.msra.mxu0 0.0
    %546 = vmatprep.subr.mxu0 0.0
    %547 = vmatpush1.msra.mxu0 0.0
    %548 = vmatprep.subr.mxu0 0.0
    %549 = vmatpush1.msra.mxu0 0.0
    %550 = vmatprep.subr.mxu0 0.0
    %551 = vmatpush1.msra.mxu0 0.0
    %552 = vmatprep.subr.mxu0 0.0
    %553 = vmatpush1.msra.mxu0 0.0
    %554 = vmatprep.subr.mxu0 0.0
    %555 = vmatpush1.msra.mxu0 0.0
    %556 = vmatprep.subr.mxu0 0.0
    %557 = vmatpush1.msra.mxu0 0.0
    %558 = vmatprep.subr.mxu0 0.0
    %559 = vmatpush1.msra.mxu0 0.0
    %560 = vmatprep.subr.mxu0 0.0
    %561 = vmatpush1.msra.mxu0 0.0
    %562 = vmatprep.subr.mxu0 0.0
    %563 = vmatpush1.msra.mxu0 0.0
    %564 = vmatprep.subr.mxu0 0.0
    %565 = vmatpush1.msra.mxu0 0.0
    %566 = vmatprep.subr.mxu0 0.0
    %567 = vmatpush1.msra.mxu0 0.0
    %568 = vmatprep.subr.mxu0 0.0
    %569 = vmatpush1.msra.mxu0 0.0
    %570 = vmatprep.subr.mxu0 0.0
    %571 = vmatpush1.msra.mxu0 0.0
    %572 = vmatprep.subr.mxu0 0.0
    %573 = vmatpush1.msra.mxu0 0.0
    %574 = vmatprep.subr.mxu0 0.0
    %575 = vmatpush1.msra.mxu0 0.0
    %576 = vmatprep.subr.mxu0 0.0
    %577 = vmatpush1.msra.mxu0 0.0
    %578 = vmatprep.subr.mxu0 0.0
    %579 = vmatpush1.msra.mxu0 0.0
    %580 = vmatprep.mubr.f32.mxu0 0.0
    %581 = vmatmul.mubr.f32.gmra.mrb[0].mxu0 %v514
    %v582 = vpop.f32.mrb[0].mxu0
    %v583 = vadd.f32 0.0, %v582
    %v584 = vpop.f32.mrb[0].mxu0
    %585 = vdwg.mxu0
    %v587 = vsel %vm207, %v583, 0
    %589 = vmatprep.subr.mxu0 0.0
    %590 = vmatpush1.msra.mxu0 %v44
    %591 = vmatprep.subr.mxu0 0.0
    %592 = vmatpush1.msra.mxu0 0.0
    %593 = vmatprep.subr.mxu0 0.0
    %594 = vmatpush1.msra.mxu0 0.0
    %595 = vmatprep.subr.mxu0 0.0
    %596 = vmatpush1.msra.mxu0 0.0
    %597 = vmatprep.subr.mxu0 0.0
    %598 = vmatpush1.msra.mxu0 0.0
    %599 = vmatprep.subr.mxu0 0.0
    %600 = vmatpush1.msra.mxu0 0.0
    %601 = vmatprep.subr.mxu0 0.0
    %602 = vmatpush1.msra.mxu0 0.0
    %603 = vmatprep.subr.mxu0 0.0
    %604 = vmatpush1.msra.mxu0 0.0
    %605 = vmatprep.subr.mxu0 0.0
    %606 = vmatpush1.msra.mxu0 0.0
    %607 = vmatprep.subr.mxu0 0.0
    %608 = vmatpush1.msra.mxu0 0.0
    %609 = vmatprep.subr.mxu0 0.0
    %610 = vmatpush1.msra.mxu0 0.0
    %611 = vmatprep.subr.mxu0 0.0
    %612 = vmatpush1.msra.mxu0 0.0
    %613 = vmatprep.subr.mxu0 0.0
    %614 = vmatpush1.msra.mxu0 0.0
    %615 = vmatprep.subr.mxu0 0.0
    %616 = vmatpush1.msra.mxu0 0.0
    %617 = vmatprep.subr.mxu0 0.0
    %618 = vmatpush1.msra.mxu0 0.0
    %619 = vmatprep.subr.mxu0 0.0
    %620 = vmatpush1.msra.mxu0 0.0
    %621 = vmatprep.subr.mxu0 0.0
    %622 = vmatpush1.msra.mxu0 0.0
    %623 = vmatprep.subr.mxu0 0.0
    %624 = vmatpush1.msra.mxu0 0.0
    %625 = vmatprep.subr.mxu0 0.0
    %626 = vmatpush1.msra.mxu0 0.0
    %627 = vmatprep.subr.mxu0 0.0
    %628 = vmatpush1.msra.mxu0 0.0
    %629 = vmatprep.subr.mxu0 0.0
    %630 = vmatpush1.msra.mxu0 0.0
    %631 = vmatprep.subr.mxu0 0.0
    %632 = vmatpush1.msra.mxu0 0.0
    %633 = vmatprep.subr.mxu0 0.0
    %634 = vmatpush1.msra.mxu0 0.0
    %635 = vmatprep.subr.mxu0 0.0
    %636 = vmatpush1.msra.mxu0 0.0
    %637 = vmatprep.subr.mxu0 0.0
    %638 = vmatpush1.msra.mxu0 0.0
    %639 = vmatprep.subr.mxu0 0.0
    %640 = vmatpush1.msra.mxu0 0.0
    %641 = vmatprep.subr.mxu0 0.0
    %642 = vmatpush1.msra.mxu0 0.0
    %643 = vmatprep.subr.mxu0 0.0
    %644 = vmatpush1.msra.mxu0 0.0
    %645 = vmatprep.subr.mxu0 0.0
    %646 = vmatpush1.msra.mxu0 0.0
    %647 = vmatprep.subr.mxu0 0.0
    %648 = vmatpush1.msra.mxu0 0.0
    %649 = vmatprep.subr.mxu0 0.0
    %650 = vmatpush1.msra.mxu0 0.0
    %651 = vmatprep.subr.mxu0 0.0
    %652 = vmatpush1.msra.mxu0 0.0
    %653 = vmatprep.mubr.f32.mxu0 0.0
    %654 = vmatmul.mubr.f32.gmra.mrb[0].mxu0 %v587
    %v655 = vpop.f32.mrb[0].mxu0
    %v656 = vadd.f32 0.0, %v655
    %v657 = vpop.f32.mrb[0].mxu0
    %658 = vdwg.mxu0
    %v659 = vadd.f32 %v506, %v656
    %v661 = vlaneseq
    %v662 = vshrl.u32 %v661, 7
    %v663 = vsub.s32 0, %v662
    %v664 = vrot.slane %v45, %v663
    %v666 = vadd.f32 %v659, %v664
    %v667 = vmax.f32 %v666, 0.0
    %v668 = vld [vmem:[%s4] sm:$0xff]
    %v669 = vld [vmem:[%s4 + $0x8] sm:$0xff]
    %v670 = vld [vmem:[%s4 + $0x10] sm:$0xff]
    %v671 = vld [vmem:[%s4 + $0x18] sm:$0xff]
    %v672 = vld [vmem:[%s5] sm:$0x1]
    %v674 = vlaneseq
    %v675 = vshrl.u32 %v674, 7
    %v676 = vsub.s32 0, %v675
    %v677 = vrot.slane %v672, %v676
    %vm679 = vcmask 261120
    %v681 = vsel %vm679, %v667, 0
    %683 = vmatprep.subr.mxu0 0.0
    %684 = vmatpush1.msra.mxu0 %v668
    %685 = vmatprep.subr.mxu0 0.0
    %686 = vmatpush1.msra.mxu0 %v669
    %687 = vmatprep.subr.mxu0 0.0
    %688 = vmatpush1.msra.mxu0 %v670
    %689 = vmatprep.subr.mxu0 0.0
    %690 = vmatpush1.msra.mxu0 %v671
    %691 = vmatprep.subr.mxu0 0.0
    %692 = vmatpush1.msra.mxu0 0.0
    %693 = vmatprep.subr.mxu0 0.0
    %694 = vmatpush1.msra.mxu0 0.0
    %695 = vmatprep.subr.mxu0 0.0
    %696 = vmatpush1.msra.mxu0 0.0
    %697 = vmatprep.subr.mxu0 0.0
    %698 = vmatpush1.msra.mxu0 0.0
    %699 = vmatprep.subr.mxu0 0.0
    %700 = vmatpush1.msra.mxu0 0.0
    %701 = vmatprep.subr.mxu0 0.0
    %702 = vmatpush1.msra.mxu0 0.0
    %703 = vmatprep.subr.mxu0 0.0
    %704 = vmatpush1.msra.mxu0 0.0
    %705 = vmatprep.subr.mxu0 0.0
    %706 = vmatpush1.msra.mxu0 0.0
    %707 = vmatprep.subr.mxu0 0.0
    %708 = vmatpush1.msra.mxu0 0.0
    %709 = vmatprep.subr.mxu0 0.0
    %710 = vmatpush1.msra.mxu0 0.0
    %711 = vmatprep.subr.mxu0 0.0
    %712 = vmatpush1.msra.mxu0 0.0
    %713 = vmatprep.subr.mxu0 0.0
    %714 = vmatpush1.msra.mxu0 0.0
    %715 = vmatprep.subr.mxu0 0.0
    %716 = vmatpush1.msra.mxu0 0.0
    %717 = vmatprep.subr.mxu0 0.0
    %718 = vmatpush1.msra.mxu0 0.0
    %719 = vmatprep.subr.mxu0 0.0
    %720 = vmatpush1.msra.mxu0 0.0
    %721 = vmatprep.subr.mxu0 0.0
    %722 = vmatpush1.msra.mxu0 0.0
    %723 = vmatprep.subr.mxu0 0.0
    %724 = vmatpush1.msra.mxu0 0.0
    %725 = vmatprep.subr.mxu0 0.0
    %726 = vmatpush1.msra.mxu0 0.0
    %727 = vmatprep.subr.mxu0 0.0
    %728 = vmatpush1.msra.mxu0 0.0
    %729 = vmatprep.subr.mxu0 0.0
    %730 = vmatpush1.msra.mxu0 0.0
    %731 = vmatprep.subr.mxu0 0.0
    %732 = vmatpush1.msra.mxu0 0.0
    %733 = vmatprep.subr.mxu0 0.0
    %734 = vmatpush1.msra.mxu0 0.0
    %735 = vmatprep.subr.mxu0 0.0
    %736 = vmatpush1.msra.mxu0 0.0
    %737 = vmatprep.subr.mxu0 0.0
    %738 = vmatpush1.msra.mxu0 0.0
    %739 = vmatprep.subr.mxu0 0.0
    %740 = vmatpush1.msra.mxu0 0.0
    %741 = vmatprep.subr.mxu0 0.0
    %742 = vmatpush1.msra.mxu0 0.0
    %743 = vmatprep.subr.mxu0 0.0
    %744 = vmatpush1.msra.mxu0 0.0
    %745 = vmatprep.subr.mxu0 0.0
    %746 = vmatpush1.msra.mxu0 0.0
    %747 = vmatprep.mubr.f32.mxu0 0.0
    %748 = vmatmul.mubr.f32.gmra.mrb[0].mxu0 %v681
    %v749 = vpop.f32.mrb[0].mxu0
    %v750 = vadd.f32 %v677, %v749
    %v751 = vpop.f32.mrb[0].mxu0
    %752 = vdwg.mxu0
    %v753 = vmax.f32 %v750, 0.0
    %v754 = vld [vmem:[%s6] sm:$0x1]
    %v755 = vld [vmem:[#allocation2] sm:$0x1]
    %757 = vset.pattern.permute.xlu0 0
    %758 = vperm.xlu0 %757, %v755
    %v759 = vpop.permute.xlu0 %758
    %v761 = vlaneseq
    %v762 = vshrl.u32 %v761, 7
    %v763 = vsub.s32 0, %v762
    %v764 = vrot.slane %v759, %v763
    %vm765 = vcmask 130048
    %v767 = vsel %vm765, %v754, 0
    %v770 = vsel %vm765, %v753, 0
    %772 = vmatprep.subr.mxu0 0.0
    %773 = vmatpush1.xpose.msra.mxu0 %v770
    %774 = vmatprep.subr.mxu0 0.0
    %775 = vmatpush1.xpose.msra.mxu0 0.0
    %776 = vmatprep.subr.mxu0 0.0
    %777 = vmatpush1.xpose.msra.mxu0 0.0
    %778 = vmatprep.subr.mxu0 0.0
    %779 = vmatpush1.xpose.msra.mxu0 0.0
    %780 = vmatprep.subr.mxu0 0.0
    %781 = vmatpush1.xpose.msra.mxu0 0.0
    %782 = vmatprep.subr.mxu0 0.0
    %783 = vmatpush1.xpose.msra.mxu0 0.0
    %784 = vmatprep.subr.mxu0 0.0
    %785 = vmatpush1.xpose.msra.mxu0 0.0
    %786 = vmatprep.subr.mxu0 0.0
    %787 = vmatpush1.xpose.msra.mxu0 0.0
    %788 = vmatprep.subr.mxu0 0.0
    %789 = vmatpush1.xpose.msra.mxu0 0.0
    %790 = vmatprep.subr.mxu0 0.0
    %791 = vmatpush1.xpose.msra.mxu0 0.0
    %792 = vmatprep.subr.mxu0 0.0
    %793 = vmatpush1.xpose.msra.mxu0 0.0
    %794 = vmatprep.subr.mxu0 0.0
    %795 = vmatpush1.xpose.msra.mxu0 0.0
    %796 = vmatprep.subr.mxu0 0.0
    %797 = vmatpush1.xpose.msra.mxu0 0.0
    %798 = vmatprep.subr.mxu0 0.0
    %799 = vmatpush1.xpose.msra.mxu0 0.0
    %800 = vmatprep.subr.mxu0 0.0
    %801 = vmatpush1.xpose.msra.mxu0 0.0
    %802 = vmatprep.subr.mxu0 0.0
    %803 = vmatpush1.xpose.msra.mxu0 0.0
    %804 = vmatprep.subr.mxu0 0.0
    %805 = vmatpush1.xpose.msra.mxu0 0.0
    %806 = vmatprep.subr.mxu0 0.0
    %807 = vmatpush1.xpose.msra.mxu0 0.0
    %808 = vmatprep.subr.mxu0 0.0
    %809 = vmatpush1.xpose.msra.mxu0 0.0
    %810 = vmatprep.subr.mxu0 0.0
    %811 = vmatpush1.xpose.msra.mxu0 0.0
    %812 = vmatprep.subr.mxu0 0.0
    %813 = vmatpush1.xpose.msra.mxu0 0.0
    %814 = vmatprep.subr.mxu0 0.0
    %815 = vmatpush1.xpose.msra.mxu0 0.0
    %816 = vmatprep.subr.mxu0 0.0
    %817 = vmatpush1.xpose.msra.mxu0 0.0
    %818 = vmatprep.subr.mxu0 0.0
    %819 = vmatpush1.xpose.msra.mxu0 0.0
    %820 = vmatprep.subr.mxu0 0.0
    %821 = vmatpush1.xpose.msra.mxu0 0.0
    %822 = vmatprep.subr.mxu0 0.0
    %823 = vmatpush1.xpose.msra.mxu0 0.0
    %824 = vmatprep.subr.mxu0 0.0
    %825 = vmatpush1.xpose.msra.mxu0 0.0
    %826 = vmatprep.subr.mxu0 0.0
    %827 = vmatpush1.xpose.msra.mxu0 0.0
    %828 = vmatprep.subr.mxu0 0.0
    %829 = vmatpush1.xpose.msra.mxu0 0.0
    %830 = vmatprep.subr.mxu0 0.0
    %831 = vmatpush1.xpose.msra.mxu0 0.0
    %832 = vmatprep.subr.mxu0 0.0
    %833 = vmatpush1.xpose.msra.mxu0 0.0
    %834 = vmatprep.subr.mxu0 0.0
    %835 = vmatpush1.xpose.msra.mxu0 0.0
    %836 = vmatprep.mubr.f32.mxu0 0.0
    %837 = vmatmul.mubr.f32.gmra.mrb[0].mxu0 %v767
    %v838 = vpop.f32.mrb[0].mxu0
    %v839 = vadd.f32 %v764, %v838
    %v840 = vpop.f32.mrb[0].mxu0
    %841 = vdwg.mxu0
    %vm842 = vcmask 57344
    %843 = vst.msk [vmem:[#allocation3] sm:$0x1] %vm842, %v839
    // Predicated region
    $region34: #{tpu_custom_call.1} parent=1 // pred_check
      _
    $region35: #{tpu_custom_call.1} parent=1 // pred_check_branch
      %845 = sbr.rel (0) target = $region37
    $region36: #{tpu_custom_call.1} parent=1 // pred_region
      %s847 = ssub.s32 16, 16
      %848 = vsyncadd [#allocation4], %s847
      %s850 = sshll.u32 [#allocation3], 4
      %s851 = int_to_ptr.vmem [resolvable:$true] %s850
      %853 = dma.vmem_to_hbm [thread:$0]  %s851, 16, %s8, [#allocation4]
    $region37: #{tpu_custom_call.1} parent=1 // pred_fallthru
      _
    // Predicated region
    $region38: #{tpu_custom_call.1} parent=1 // pred_check
      _
    $region39: #{tpu_custom_call.1} parent=1 // pred_check_branch
      %855 = sbr.rel (0) target = $region41
    $region40: #{tpu_custom_call.1} parent=1 // pred_region
      %856 = dma.done [#allocation4], 16
    $region41: #{tpu_custom_call.1} parent=1 // pred_fallthru
      _
    %857 = vsyncpa [#allocation4], 1

</llo_original>
